<compile_context>
chip_gen: v7x
topology: tpu7x:2x2x1
jax: 0.10.0
libtpu: 0.0.40
codegen_flags: <defaults>
</compile_context>

<pallas_src>
import numpy as np
from functools import partial

import jax
import jax.numpy as jnp
from jax.experimental import pallas as pl
from jax.experimental.pallas import tpu as pltpu

try:  # C implementation if present; numpy fallback below otherwise.
    from scipy.optimize import linear_sum_assignment as _scipy_lsa
except Exception:  # pragma: no cover
    _scipy_lsa = None


# ----------------------------------------------------------------------------
# Pallas kernel
# ----------------------------------------------------------------------------
def _cost_kernel(sizes_ref, logits_ref, tlab_ref, ppts_ref, tpts_ref, out_ref,
                 lhs_sc, pts_sc,
                 *, num_classes, point_dim, w_class, w_point, tn):
    # sizes_ref:  (bs,)        SMEM, per-batch number of real targets
    # logits_ref: (TM, C)      raw pred_logits tile for this (batch, query-tile)
    # tlab_ref:   (C+1, TN)    multi-hot labels (transposed, bf16) + ones row
    # ppts_ref:   (TM, P)      predicted points tile
    # tpts_ref:   (P, TN)      target points (transposed, per-batch padded)
    # out_ref:    (TM, TN)     cost tile
    # lhs_sc:     (TM, C+1)    cached matmul LHS: [-scale*x | scale*sum softplus]
    # pts_sc:     (TM, P)      cached pre-scaled predicted points
    b = pl.program_id(0)
    tj = pl.program_id(2)
    s_b = sizes_ref[b]

    scale = float(w_class) / float(num_classes)
    prescale_pts = float(w_point) >= 0.0          # |w*a - w*b| = w*|a-b| needs w>=0
    pw = float(w_point) if prescale_pts else 1.0

    # Skip target tiles that are entirely padding for this batch (the host
    # only ever reads cost[b, :nq, :s_b]); skipped output tiles stay garbage.
    @pl.when(tj * tn < s_b)
    def _():
        # Target-tile-invariant work, computed once per (batch, query-tile).
        @pl.when(tj == 0)
        def _():
            x = logits_ref[...].astype(jnp.float32)
            # torch maps NaN probabilities to 0 -> log(p) clamps to -100, log(1-p)=0.
            x = jnp.where(jnp.isnan(x), -100.0, x)
            # emulate torch's BCE log clamp at -100.
            x = jnp.clip(x, -100.0, 100.0)
            # class cost = scale * (sum_c softplus(x) - x . t); bias is folded
            # into the matmul via an appended LHS column / ones row in tlab.
            lhs_sc[:, 0:num_classes] = (-scale) * x
            sp = jnp.maximum(x, 0.0) + jnp.log(1.0 + jnp.exp(-jnp.abs(x)))
            lhs_sc[:, num_classes:num_classes + 1] = (
                scale * jnp.sum(sp, axis=-1, keepdims=True))
            pts_sc[...] = pw * ppts_ref[...].astype(jnp.float32)

        # ---- class cost (incl. softplus bias): one small-K MXU matmul ----
        t = tlab_ref[...].astype(jnp.float32)                          # (C+1, TN)
        cls = jnp.dot(lhs_sc[...], t, preferred_element_type=jnp.float32)  # (TM, TN)

        # ---- point cost: L1 cdist over the (tiny) point dimension ----
        tpt = tpts_ref[...].astype(jnp.float32)                        # (P, TN)
        if prescale_pts:
            tpt = pw * tpt
        pts = pts_sc[...]                                              # (TM, P)
        acc = jnp.abs(pts[:, 0:1] - tpt[0:1, :])
        for d in range(1, point_dim):
            acc = acc + jnp.abs(pts[:, d:d + 1] - tpt[d:d + 1, :])
        if not prescale_pts:
            acc = float(w_point) * acc

        out_ref[...] = (cls + acc).astype(out_ref.dtype)


def _round_up(x, m):
    return ((x + m - 1) // m) * m


def _pick_tile(extent, max_tile, align):
    """Tile size minimizing padding: round_up(ceil(e / ceil(e/max)), align)."""
    extent = max(int(extent), 1)
    ext_a = _round_up(extent, align)
    max_tile = max(int(max_tile), align)
    n_tiles = -(-ext_a // max_tile)
    tile = _round_up(-(-ext_a // n_tiles), align)
    return tile, tile * n_tiles


@partial(jax.jit,
         static_argnames=("tm", "tn", "nq_pad", "w_class", "w_point", "out_dtype"))
def _cost_blocks_device(sizes, logits, tlab, ppts, tpts, *, tm, tn, nq_pad,
                        w_class, w_point, out_dtype):
    bs, nq, C = logits.shape
    P = ppts.shape[-1]
    Cp1, S_pad = tlab.shape[1], tlab.shape[2]

    if nq_pad != nq:  # fuses under jit; no eager pad copies
        logits = jnp.pad(logits, ((0, 0), (0, nq_pad - nq), (0, 0)))
        ppts = jnp.pad(ppts, ((0, 0), (0, nq_pad - nq), (0, 0)))

    kernel = partial(_cost_kernel, num_classes=C, point_dim=P,
                     w_class=w_class, w_point=w_point, tn=tn)

    out_sz = jnp.dtype(out_dtype).itemsize
    # double-buffered input/output tiles + scratch, with headroom (capped for v7x)
    need = 2 * (tm * tn * out_sz + tm * C * 4 + Cp1 * tn * 2
                + tm * P * 4 + P * tn * 4) + tm * Cp1 * 4 + tm * P * 4
    vmem_limit = int(min(max(need + (8 << 20), 32 << 20), 64 << 20))

    grid = (bs, nq_pad // tm, S_pad // tn)
    return pl.pallas_call(
        kernel,
        out_shape=jax.ShapeDtypeStruct((bs, nq_pad, S_pad), out_dtype),
        grid_spec=pltpu.PrefetchScalarGridSpec(
            num_scalar_prefetch=1,
            grid=grid,
            in_specs=[
                pl.BlockSpec((None, tm, C), lambda b, i, j, sz: (b, i, 0)),
                pl.BlockSpec((None, Cp1, tn), lambda b, i, j, sz: (b, 0, j)),
                pl.BlockSpec((None, tm, P), lambda b, i, j, sz: (b, i, 0)),
                pl.BlockSpec((None, P, tn), lambda b, i, j, sz: (b, 0, j)),
            ],
            out_specs=pl.BlockSpec((None, tm, tn), lambda b, i, j, sz: (b, i, j)),
            scratch_shapes=[
                pltpu.VMEM((tm, C + 1), jnp.float32),   # pre-scaled LHS + bias col
                pltpu.VMEM((tm, P), jnp.float32),       # pre-scaled predicted points
            ]),
        compiler_params=pltpu.CompilerParams(
            dimension_semantics=("parallel", "parallel", "arbitrary"),
            vmem_limit_bytes=vmem_limit),
    )(sizes, logits, tlab, ppts, tpts)


def compute_cost_blocks(pred_logits, pred_points, labels_list, points_list,
                        cost_class=2.0, cost_point=5.0,
                        tm_max=512, tn_max=4096, out_dtype=jnp.float32):
    """Per-batch block-diagonal cost matrix.

    Returns (cost, sizes) with cost of shape (bs, NQ_pad, S_pad); only
    cost[b, :nq, :sizes[b]] is meaningful (matches the torch cost block for
    batch b).  Padded regions may contain garbage (skipped tiles)."""
    bs, nq, C = pred_logits.shape
    P = pred_points.shape[-1]
    assert len(labels_list) == bs and len(points_list) == bs
    sizes = [int(np.asarray(p).shape[0]) for p in points_list]
    max_s = max(sizes) if sizes else 0

    TM, NQ_pad = _pick_tile(nq, tm_max, 8)       # query axis (sublane)
    TN, S_pad = _pick_tile(max_s, tn_max, 128)   # target axis (lane)

    # Host-side packing of the (tiny) per-batch targets into lane-dense,
    # pre-transposed, per-batch padded tensors, plus an all-ones "bias" row
    # over the real target columns so the softplus bias rides the MXU matmul.
    tlab = np.zeros((bs, C + 1, S_pad), np.float32)
    tpts = np.zeros((bs, P, S_pad), np.float32)
    for b in range(bs):
        s = sizes[b]
        if s:
            tlab[b, :C, :s] = np.asarray(labels_list[b], np.float32).T
            tlab[b, C, :s] = 1.0
            tpts[b, :, :s] = np.asarray(points_list[b], np.float32).T
    tlab_j = jnp.asarray(tlab, dtype=jnp.bfloat16)   # 0/1 exact in bf16
    tpts_j = jnp.asarray(tpts)
    sizes_j = jnp.asarray(np.asarray(sizes, np.int32))

    out = _cost_blocks_device(
        sizes_j,
        jnp.asarray(pred_logits, jnp.float32),
        tlab_j,
        jnp.asarray(pred_points, jnp.float32),
        tpts_j,
        tm=TM, tn=TN, nq_pad=NQ_pad,
        w_class=float(cost_class), w_point=float(cost_point),
        out_dtype=out_dtype)
    return out, sizes


# ----------------------------------------------------------------------------
# Host-side Hungarian algorithm
# ----------------------------------------------------------------------------
# TODO(synk): linear_sum_assignment is inherently sequential / data-dependent;
# it stays on the host (scipy C impl if available, vectorized numpy otherwise).
def linear_sum_assignment_np(cost):
    cost = np.asarray(cost, dtype=np.float64)
    transposed = cost.shape[0] > cost.shape[1]
    if transposed:
        cost = cost.T
    n, m = cost.shape  # n <= m
    if n == 0:
        e = np.zeros(0, np.int64)
        return (e, e)
    INF = np.inf
    u = np.zeros(n + 1)
    v = np.zeros(m + 1)
    p = np.zeros(m + 1, dtype=np.int64)
    way = np.zeros(m + 1, dtype=np.int64)
    for i in range(1, n + 1):
        p[0] = i
        j0 = 0
        minv = np.full(m + 1, INF)
        used = np.zeros(m + 1, dtype=bool)
        while True:
            used[j0] = True
            i0 = p[j0]
            cur = cost[i0 - 1, :] - u[i0] - v[1:]
            better = (~used[1:]) & (cur < minv[1:])
            minv[1:] = np.where(better, cur, minv[1:])
            way[1:] = np.where(better, j0, way[1:])
            cand = np.where(used[1:], INF, minv[1:])
            j1 = int(np.argmin(cand)) + 1
            delta = cand[j1 - 1]
            u[p[used]] += delta
            v[used] -= delta
            minv[1:] = np.where(used[1:], minv[1:], minv[1:] - delta)
            j0 = j1
            if p[j0] == 0:
                break
        while j0:
            j1 = way[j0]
            p[j0] = p[j1]
            j0 = j1
    rows, cols = [], []
    for j in range(1, m + 1):
        if p[j] != 0:
            rows.append(p[j] - 1)
            cols.append(j - 1)
    rows = np.asarray(rows, dtype=np.int64)
    cols = np.asarray(cols, dtype=np.int64)
    if transposed:
        rows, cols = cols, rows
    order = np.argsort(rows, kind="stable")
    return rows[order], cols[order]


def _lsa(cost):
    if _scipy_lsa is not None:
        r, c = _scipy_lsa(np.asarray(cost, np.float64))
        return np.asarray(r, np.int64), np.asarray(c, np.int64)
    return linear_sum_assignment_np(cost)


# ----------------------------------------------------------------------------
# Module wrapper with the same forward semantics as the PyTorch HungarianMatcher
# ----------------------------------------------------------------------------
class HungarianMatcherPallas:
    def __init__(self, cost_class: float = 2, cost_bbox: float = 5,
                 cost_point: float = 5, cost_dtype=jnp.bfloat16, **kwargs):
        self.cost_class = cost_class
        self.cost_bbox = cost_bbox
        self.cost_point = cost_point
        self.cost_dtype = cost_dtype
        assert cost_class != 0 or cost_bbox != 0 or cost_point != 0, \
            "all costs cant be 0"

    def __call__(self, outputs, targets):
        pred_logits = outputs["pred_logits"]   # (bs, nq, C)
        pred_points = outputs["pred_points"]   # (bs, nq, P)
        labels_list = [v["labels"] for v in targets]  # each (s_b, C) multi-hot
        points_list = [v["points"] for v in targets]  # each (s_b, P)
        nq = pred_logits.shape[1]

        C_blocks, sizes = compute_cost_blocks(
            pred_logits, pred_points, labels_list, points_list,
            cost_class=self.cost_class, cost_point=self.cost_point,
            out_dtype=self.cost_dtype)
        # Single D2H copy of the padded block-diagonal costs; padded rows /
        # columns are sliced off host-side (free) instead of on device.
        C_np = np.asarray(jax.block_until_ready(C_blocks)).astype(np.float32)

        indices = []
        for b, s in enumerate(sizes):
            r, c = _lsa(C_np[b, :nq, :s])
            indices.append((np.asarray(r, np.int64), np.asarray(c, np.int64)))
        return indices


# ----------------------------------------------------------------------------
# Demo / self-check
# ----------------------------------------------------------------------------
def _numpy_reference_block(logits_b, points_b, labels_b, tpoints_b,
                           w_class, w_point):
    """Original (torch) semantics for one batch element, in float64."""
    x = np.asarray(logits_b, np.float64)                 # (nq, C)
    p = 1.0 / (1.0 + np.exp(-x))
    p = np.where(np.isnan(p), 0.0, p)
    with np.errstate(divide="ignore"):
        lp = np.maximum(np.log(p), -100.0)
        l1p = np.maximum(np.log(1.0 - p), -100.0)
    t = np.asarray(labels_b, np.float64)                 # (s, C)
    bce = -(t[None, :, :] * lp[:, None, :] + (1.0 - t[None, :, :]) * l1p[:, None, :])
    cost_class = bce.mean(-1)                            # (nq, s)
    pts = np.asarray(points_b, np.float64)
    tpt = np.asarray(tpoints_b, np.float64)
    cost_point = np.abs(pts[:, None, :] - tpt[None, :, :]).sum(-1)
    return w_point * cost_point + w_class * cost_class


def _make_targets(key, sizes, num_classes, pdim):
    targets = []
    for i, s in enumerate(sizes):
        kl, kp = jax.random.split(jax.random.fold_in(key, i))
        labels = (jax.random.uniform(kl, (s, num_classes)) > 0.5).astype(jnp.float32)
        pts = jax.random.uniform(kp, (s, pdim), jnp.float32)
        targets.append({"labels": labels, "points": pts})
    return targets


if __name__ == "__main__":
    key = jax.random.PRNGKey(0)
    bs, nq, num_classes, pdim = 2, 8, 4, 2
    k1, k2, k3, k4 = jax.random.split(key, 4)

    pred_logits = jax.random.normal(k1, (bs, nq, num_classes), jnp.float32)
    pred_points = jax.random.uniform(k2, (bs, nq, pdim), jnp.float32)
    outputs = {"pred_logits": pred_logits, "pred_points": pred_points}

    sizes = [3, 5]
    targets = _make_targets(k3, sizes, num_classes, pdim)

    # ---- f32 value check of the Pallas cost kernel vs. torch semantics ----
    C_blocks, _ = compute_cost_blocks(
        pred_logits, pred_points,
        [t["labels"] for t in targets], [t["points"] for t in targets],
        cost_class=2.0, cost_point=5.0, out_dtype=jnp.float32)
    C_np = np.asarray(jax.block_until_ready(C_blocks))
    for b, s in enumerate(sizes):
        ref = _numpy_reference_block(pred_logits[b], pred_points[b],
                                     targets[b]["labels"], targets[b]["points"],
                                     w_class=2.0, w_point=5.0)
        np.testing.assert_allclose(C_np[b, :nq, :s], ref, rtol=1e-4, atol=1e-4)

    # ---- second check: multi query/target tiles + per-batch tile skip ----
    nq2, sizes2 = 16, [150, 40]
    pl2 = jax.random.normal(jax.random.fold_in(k4, 0), (2, nq2, num_classes), jnp.float32)
    pp2 = jax.random.uniform(jax.random.fold_in(k4, 1), (2, nq2, pdim), jnp.float32)
    tg2 = _make_targets(jax.random.fold_in(k4, 2), sizes2, num_classes, pdim)
    C2, _ = compute_cost_blocks(pl2, pp2,
                                [t["labels"] for t in tg2],
                                [t["points"] for t in tg2],
                                cost_class=2.0, cost_point=5.0,
                                tm_max=8, tn_max=128,      # force a (2,2,2) grid
                                out_dtype=jnp.float32)
    C2 = np.asarray(jax.block_until_ready(C2))
    for b, s in enumerate(sizes2):
        ref = _numpy_reference_block(pl2[b], pp2[b],
                                     tg2[b]["labels"], tg2[b]["points"],
                                     w_class=2.0, w_point=5.0)
        np.testing.assert_allclose(C2[b, :nq2, :s], ref, rtol=1e-4, atol=1e-4)

    # ---- full matcher forward (bf16 cost tiles + host Hungarian) ----
    matcher = HungarianMatcherPallas(cost_class=2, cost_bbox=5, cost_point=5)
    indices = matcher(outputs, targets)
    for b, ((r, c), s) in enumerate(zip(indices, sizes)):
        assert len(r) == len(c) == min(nq, s)
        ref = _numpy_reference_block(pred_logits[b], pred_points[b],
                                     targets[b]["labels"], targets[b]["points"],
                                     w_class=2.0, w_point=5.0)
        rr, cc = _lsa(ref)
        opt_cost = float(ref[rr, cc].sum())
        got_cost = float(ref[r, c].sum())
        # bf16 cost tiles: the assignment must stay (near-)optimal on exact costs.
        assert got_cost <= opt_cost * (1.0 + 1e-2) + 1e-6, (got_cost, opt_cost)

    print("KERNEL_OK")
</pallas_src>

<mosaic_0001>
module attributes {stable_mosaic.version = 11 : i64} {
  func.func @_cost_kernel(%arg0: i32, %arg1: i32, %arg2: i32, %arg3: memref<2xi32, #tpu.memory_space<smem>>, %arg4: memref<1x8x4xf32, #tpu.memory_space<vmem>>, %arg5: memref<1x5x128xbf16, #tpu.memory_space<vmem>>, %arg6: memref<1x8x2xf32, #tpu.memory_space<vmem>>, %arg7: memref<1x2x128xf32, #tpu.memory_space<vmem>>, %arg8: memref<1x8x128xf32, #tpu.memory_space<vmem>>, %arg9: memref<8x5xf32, #tpu.memory_space<vmem>>, %arg10: memref<8x2xf32, #tpu.memory_space<vmem>>) attributes {dimension_semantics = [#tpu.dimension_semantics<parallel>, #tpu.dimension_semantics<parallel>, #tpu.dimension_semantics<arbitrary>], iteration_bounds = array<i64: 2, 1, 1>, scalar_prefetch = 1 : i64, scratch_operands = 2 : i64, tpu.core_type = #tpu.core_type<tc>, window_params = [{transform_indices = @transform_0, window_bounds = array<i64: 1, 8, 4>}, {transform_indices = @transform_1, window_bounds = array<i64: 1, 5, 128>}, {transform_indices = @transform_2, window_bounds = array<i64: 1, 8, 2>}, {transform_indices = @transform_3, window_bounds = array<i64: 1, 2, 128>}, {transform_indices = @transform_4, window_bounds = array<i64: 1, 8, 128>}]} {
    %0 = arith.index_cast %arg0 : i32 to index
    %1 = memref.load %arg3[%0] : memref<2xi32, #tpu.memory_space<smem>>
    %c128_i32 = arith.constant 128 : i32
    %2 = arith.muli %arg2, %c128_i32 : i32
    %3 = arith.cmpi slt, %2, %1 : i32
    %4 = arith.extui %3 : i1 to i32
    %c0_i32 = arith.constant 0 : i32
    %5 = arith.cmpi ne, %4, %c0_i32 : i32
    scf.if %5 {
      %c0_i32_0 = arith.constant 0 : i32
      %6 = arith.cmpi eq, %arg2, %c0_i32_0 : i32
      %7 = arith.extui %6 : i1 to i32
      %c0_i32_1 = arith.constant 0 : i32
      %8 = arith.cmpi ne, %7, %c0_i32_1 : i32
      scf.if %8 {
        %c0_15 = arith.constant 0 : index
        %c0_16 = arith.constant 0 : index
        %c0_17 = arith.constant 0 : index
        %36 = vector.load %arg4[%c0_15, %c0_16, %c0_17] : memref<1x8x4xf32, #tpu.memory_space<vmem>>, vector<1x8x4xf32>
        %37 = vector.shape_cast %36 : vector<1x8x4xf32> to vector<8x4xf32>
        %38 = arith.cmpf one, %37, %37 : vector<8x4xf32>
        %cst_18 = arith.constant -1.000000e+02 : f32
        %39 = vector.broadcast %cst_18 : f32 to vector<8x4xf32>
        %40 = arith.select %38, %39, %37 : vector<8x4xi1>, vector<8x4xf32>
        %cst_19 = arith.constant -1.000000e+02 : f32
        %cst_20 = arith.constant 1.000000e+02 : f32
        %41 = vector.broadcast %cst_19 : f32 to vector<8x4xf32>
        %42 = arith.maximumf %41, %40 : vector<8x4xf32>
        %43 = vector.broadcast %cst_20 : f32 to vector<8x4xf32>
        %44 = arith.minimumf %43, %42 : vector<8x4xf32>
        %cst_21 = arith.constant -5.000000e-01 : f32
        %45 = vector.broadcast %cst_21 : f32 to vector<8x4xf32>
        %46 = arith.mulf %45, %44 : vector<8x4xf32>
        %c0_22 = arith.constant 0 : index
        %c0_23 = arith.constant 0 : index
        %47 = vector.load %arg9[%c0_22, %c0_23] : memref<8x5xf32, #tpu.memory_space<vmem>>, vector<8x4xf32>
        tpu.vector_store %arg9[%c0_22, %c0_23], %46 {strides = array<i32>} : memref<8x5xf32, #tpu.memory_space<vmem>>, vector<8x4xf32>,
        %cst_24 = arith.constant 0.000000e+00 : f32
        %48 = vector.broadcast %cst_24 : f32 to vector<8x4xf32>
        %49 = arith.maximumf %44, %48 : vector<8x4xf32>
        %50 = math.absf %44 : vector<8x4xf32>
        %cst_25 = arith.constant 0.000000e+00 : f32
        %51 = vector.broadcast %cst_25 : f32 to vector<8x4xf32>
        %52 = arith.subf %51, %50 : vector<8x4xf32>
        %53 = math.exp %52 : vector<8x4xf32>
        %cst_26 = arith.constant 1.000000e+00 : f32
        %54 = vector.broadcast %cst_26 : f32 to vector<8x4xf32>
        %55 = arith.addf %54, %53 : vector<8x4xf32>
        %56 = math.log %55 : vector<8x4xf32>
        %57 = arith.addf %49, %56 : vector<8x4xf32>
        %cst_27 = arith.constant dense<0.000000e+00> : vector<8xf32>
        %58 = vector.multi_reduction <add>, %57, %cst_27 [1] : vector<8x4xf32> to vector<8xf32>
        %59 = vector.shape_cast %58 : vector<8xf32> to vector<8x1xf32>
        %cst_28 = arith.constant 5.000000e-01 : f32
        %60 = vector.broadcast %cst_28 : f32 to vector<8x1xf32>
        %61 = arith.mulf %60, %59 : vector<8x1xf32>
        %c0_29 = arith.constant 0 : index
        %c4 = arith.constant 4 : index
        %62 = vector.load %arg9[%c0_29, %c4] : memref<8x5xf32, #tpu.memory_space<vmem>>, vector<8x1xf32>
        tpu.vector_store %arg9[%c0_29, %c4], %61 {strides = array<i32>} : memref<8x5xf32, #tpu.memory_space<vmem>>, vector<8x1xf32>,
        %c0_30 = arith.constant 0 : index
        %c0_31 = arith.constant 0 : index
        %c0_32 = arith.constant 0 : index
        %63 = vector.load %arg6[%c0_30, %c0_31, %c0_32] : memref<1x8x2xf32, #tpu.memory_space<vmem>>, vector<1x8x2xf32>
        %64 = vector.shape_cast %63 : vector<1x8x2xf32> to vector<8x2xf32>
        %cst_33 = arith.constant 5.000000e+00 : f32
        %65 = vector.broadcast %cst_33 : f32 to vector<8x2xf32>
        %66 = arith.mulf %65, %64 : vector<8x2xf32>
        %c0_34 = arith.constant 0 : index
        %c0_35 = arith.constant 0 : index
        %67 = vector.load %arg10[%c0_34, %c0_35] : memref<8x2xf32, #tpu.memory_space<vmem>>, vector<8x2xf32>
        tpu.vector_store %arg10[%c0_34, %c0_35], %66 {strides = array<i32>} : memref<8x2xf32, #tpu.memory_space<vmem>>, vector<8x2xf32>,
      } else {
      }
      %c0 = arith.constant 0 : index
      %c0_2 = arith.constant 0 : index
      %c0_3 = arith.constant 0 : index
      %9 = vector.load %arg5[%c0, %c0_2, %c0_3] : memref<1x5x128xbf16, #tpu.memory_space<vmem>>, vector<1x5x128xbf16>
      %10 = vector.shape_cast %9 : vector<1x5x128xbf16> to vector<5x128xbf16>
      %11 = arith.extf %10 : vector<5x128xbf16> to vector<5x128xf32>
      %c0_4 = arith.constant 0 : index
      %c0_5 = arith.constant 0 : index
      %12 = vector.load %arg9[%c0_4, %c0_5] : memref<8x5xf32, #tpu.memory_space<vmem>>, vector<8x5xf32>
      %cst = arith.constant dense<0.000000e+00> : vector<8x128xf32>
      %13 = tpu.matmul %12, %11, %cst {dimension_numbers = #tpu.dot_dimension_numbers<[1], [0], [0], [1], [0, 0, 1, 1], [], []>} : vector<8x5xf32>, vector<5x128xf32>, vector<8x128xf32> -> vector<8x128xf32>
      %c0_6 = arith.constant 0 : index
      %c0_7 = arith.constant 0 : index
      %c0_8 = arith.constant 0 : index
      %14 = vector.load %arg7[%c0_6, %c0_7, %c0_8] : memref<1x2x128xf32, #tpu.memory_space<vmem>>, vector<1x2x128xf32>
      %15 = vector.shape_cast %14 : vector<1x2x128xf32> to vector<2x128xf32>
      %cst_9 = arith.constant 5.000000e+00 : f32
      %16 = vector.broadcast %cst_9 : f32 to vector<2x128xf32>
      %17 = arith.mulf %16, %15 : vector<2x128xf32>
      %c0_10 = arith.constant 0 : index
      %c0_11 = arith.constant 0 : index
      %18 = vector.load %arg10[%c0_10, %c0_11] : memref<8x2xf32, #tpu.memory_space<vmem>>, vector<8x2xf32>
      %19 = vector.extract_strided_slice %18 {offsets = [0, 0], sizes = [8, 1], strides = [1, 1]} : vector<8x2xf32> to vector<8x1xf32>
      %20 = vector.extract_strided_slice %17 {offsets = [0, 0], sizes = [1, 128], strides = [1, 1]} : vector<2x128xf32> to vector<1x128xf32>
      %21 = vector.broadcast %19 : vector<8x1xf32> to vector<8x128xf32>
      %22 = vector.broadcast %20 : vector<1x128xf32> to vector<8x128xf32>
      %23 = arith.subf %21, %22 : vector<8x128xf32>
      %24 = math.absf %23 : vector<8x128xf32>
      %25 = vector.extract_strided_slice %18 {offsets = [0, 1], sizes = [8, 1], strides = [1, 1]} : vector<8x2xf32> to vector<8x1xf32>
      %26 = vector.extract_strided_slice %17 {offsets = [1, 0], sizes = [1, 128], strides = [1, 1]} : vector<2x128xf32> to vector<1x128xf32>
      %27 = vector.broadcast %25 : vector<8x1xf32> to vector<8x128xf32>
      %28 = vector.broadcast %26 : vector<1x128xf32> to vector<8x128xf32>
      %29 = arith.subf %27, %28 : vector<8x128xf32>
      %30 = math.absf %29 : vector<8x128xf32>
      %31 = arith.addf %24, %30 : vector<8x128xf32>
      %32 = arith.addf %13, %31 : vector<8x128xf32>
      %c0_12 = arith.constant 0 : index
      %c0_13 = arith.constant 0 : index
      %c0_14 = arith.constant 0 : index
      %33 = vector.load %arg8[%c0_12, %c0_13, %c0_14] : memref<1x8x128xf32, #tpu.memory_space<vmem>>, vector<1x8x128xf32>
      %34 = vector.shape_cast %33 : vector<1x8x128xf32> to vector<8x128xf32>
      %35 = vector.shape_cast %32 : vector<8x128xf32> to vector<1x8x128xf32>
      tpu.vector_store %arg8[%c0_12, %c0_13, %c0_14], %35 {strides = array<i32>} : memref<1x8x128xf32, #tpu.memory_space<vmem>>, vector<1x8x128xf32>,
    } else {
    }
    return
  }
  func.func @transform_0(%arg0: i32, %arg1: i32, %arg2: i32, %arg3: memref<2xi32, #tpu.memory_space<smem>>) -> (i32, i32, i32) {
    %c0_i32 = arith.constant 0 : i32
    %c0_i32_0 = arith.constant 0 : i32
    return %arg0, %arg1, %c0_i32 : i32, i32, i32
  }
  func.func @transform_1(%arg0: i32, %arg1: i32, %arg2: i32, %arg3: memref<2xi32, #tpu.memory_space<smem>>) -> (i32, i32, i32) {
    %c0_i32 = arith.constant 0 : i32
    %c0_i32_0 = arith.constant 0 : i32
    return %arg0, %c0_i32, %arg2 : i32, i32, i32
  }
  func.func @transform_2(%arg0: i32, %arg1: i32, %arg2: i32, %arg3: memref<2xi32, #tpu.memory_space<smem>>) -> (i32, i32, i32) {
    %c0_i32 = arith.constant 0 : i32
    %c0_i32_0 = arith.constant 0 : i32
    return %arg0, %arg1, %c0_i32 : i32, i32, i32
  }
  func.func @transform_3(%arg0: i32, %arg1: i32, %arg2: i32, %arg3: memref<2xi32, #tpu.memory_space<smem>>) -> (i32, i32, i32) {
    %c0_i32 = arith.constant 0 : i32
    %c0_i32_0 = arith.constant 0 : i32
    return %arg0, %c0_i32, %arg2 : i32, i32, i32
  }
  func.func @transform_4(%arg0: i32, %arg1: i32, %arg2: i32, %arg3: memref<2xi32, #tpu.memory_space<smem>>) -> (i32, i32, i32) {
    %c0_i32 = arith.constant 0 : i32
    return %arg0, %arg1, %arg2 : i32, i32, i32
  }
}

</mosaic_0001>

<llo_original>
// kernel: _cost_blocks_device.1
$region0: #{_cost_blocks_device.1}
  #allocation0 [shape = 'u32[]', space=smem, size = 0x4, offset = 0x4, fixed_abs, tag = 'smem constant byte address 0x4 - core index']
  #allocation1 [shape = 'u32[144,128]{1,0:T(1,128)}', space=vmem, size = 0x12000, scoped, tag = 'internal scratch']
  #allocation2 [shape = 'f32[8,5]{1,0:T(8,128)}', space=vmem, size = 0x1000, scoped, tag = 'scratch operand']
  #allocation3 [shape = 'f32[8,2]{1,0:T(8,128)}', space=vmem, size = 0x1000, scoped, tag = 'scratch operand']
  #allocation4 [shape = 's32[1]{0}', space=sflag, size = 0x4, scoped, tag = 'scoped memory for _cost_blocks_device.1']
  #allocation5 [shape = 'u8[512]{0}', space=smem, size = 0x200, scoped, tag = 'prefetched SMEM operand 0']
  %s0 = inlined_call_operand.vmem [shape: s32[2], index: 0, kind: input, shape index: {}]
  %s1 = inlined_call_operand.vmem [shape: f32[2,8,4], index: 1, kind: input, shape index: {}]
  %s2 = inlined_call_operand.vmem [shape: bf16[2,5,128], index: 2, kind: input, shape index: {}]
  %s3 = inlined_call_operand.vmem [shape: f32[2,8,2], index: 3, kind: input, shape index: {}]
  %s4 = inlined_call_operand.vmem [shape: f32[2,2,128], index: 4, kind: input, shape index: {}]
  %s5 = inlined_call_operand.hbm [shape: f32[2,8,128], index: 5, kind: output, shape index: {}]
  %s6 = sld [smem:[#allocation0]]
  $region57: #{_cost_blocks_device.1} parent=0
    _
  %s8 = ssub.s32 1, %s6
  %s9 = scalar_select 0, %s8, %s6
  %s10 = sshll.u32 %s0, 4
  %s11 = int_to_ptr.vmem [resolvable:$true] %s10
  %13 = dma.vmem_to_smem %s11, 16, [#allocation5], [#allocation4]
  %14 = dma.done [#allocation4], 16
  %15 = sfence
  $region1: #{_cost_blocks_device.1} parent=0
    #allocation6 [shape = 'u8[8192]{0}', space=vmem, size = 0x2000, scoped, tag = 'output window, operand 0']
    #allocation7 [shape = 's32[2]{0}', space=sflag, size = 0x8, scoped, tag = 'scoped memory for _cost_blocks_device.1']
    %16 = vsyncpa [#allocation7], 0
    %s17 = scalar_lea.sflag [#allocation7], 1
    %18 = vsyncpa %s17, 0
    loop: start=0, step=1, limit=4
    $region2: #{_cost_blocks_device.1} parent=1 // loop_pre_header
      _
    $region3: #{_cost_blocks_device.1} parent=1 // loop_header
      %s20 = sphi 0, %s24
      %p21 = scmp.ge.s32.totalorder %s20, 4
      %s27 = sphi 0, %s46
      %s28 = sphi 0, %s42
      %s29 = sphi 0, %s38
      %s30 = sphi 0, %s27
      %s31 = sphi 0, %s28
      %s32 = sphi 0, %s29
      %s33 = sphi 0, %s30
      %s34 = sphi 0, %s31
      %s35 = sphi 0, %s32
      %s51 = sphi 0, %s53
      %s54 = sphi 0, %s51
      %s55 = sphi 0, %s54
      %s71 = sphi 0, %s55
      %s79 = sphi 0, %s81
      %s82 = sphi 0, %s79
      %s83 = sphi 0, %s82
      %s99 = sphi 0, %s83
      %s107 = sphi 0, %s109
      %s110 = sphi 0, %s107
      %s111 = sphi 0, %s110
      %s127 = sphi 0, %s111
      %s135 = sphi 0, %s137
      %s138 = sphi 0, %s135
      %s139 = sphi 0, %s138
      %s155 = sphi 0, %s139
      %s165 = sphi 0, %s167
      %s168 = sphi 0, %s165
      %s169 = sphi 0, %s168
      %s185 = sphi 0, %s169
    $region4: #{_cost_blocks_device.1} parent=1 // loop_header_branch
      %23 = sbr.rel (%p21) target = $region8
    $region5: #{_cost_blocks_device.1} parent=1 // loop_body
      %s25 = ssub.s32 %s20, 1
      %s26 = ssub.s32 %s20, 2
      %s36 = sadd.s32 1, %s29
      %p37 = scmp.ge.s32.totalorder %s36, 1
      %s38 = scalar_select %p37, 0, %s36
      %s39 = sadd.s32 1, %s28
      %s40 = scalar_select %p37, %s39, %s28
      %p41 = scmp.ge.s32.totalorder %s40, 1
      %s42 = scalar_select %p41, 0, %s40
      %s43 = sadd.s32 1, %s27
      %s44 = scalar_select %p41, %s43, %s27
      %p45 = scmp.ge.s32.totalorder %s44, 2
      %s46 = scalar_select %p45, 0, %s44
      %s47 = ssub.s32 %s27, %s46
      %s48 = ssub.s32 %s28, %s42
      %s49 = sor.u32 %s47, %s48
      %p50 = scmp.eq.s32.totalorder %s49, 0
      %s52 = sadd.s32 %s51, 1
      %s53 = scalar_select %p50, %s51, %s52
      %p56 = pneg %p50
      %p57 = scmp.eq.s32.totalorder %s20, 1
      %p58 = por %p56, %p57
      %p59 = scmp.ne.s32.totalorder %s51, %s54
      %p60 = scmp.eq.s32.totalorder %s20, 0
      %p61 = por %p59, %p60
      %p62 = scmp.ne.s32.totalorder %s51, %s54
      %p63 = scmp.eq.s32.totalorder %s25, 1
      %p64 = por %p62, %p63
      %p65 = scmp.ne.s32.totalorder %s54, %s55
      %p66 = scmp.eq.s32.totalorder %s25, 0
      %p67 = por %p65, %p66
      %p68 = scmp.ne.s32.totalorder %s54, %s55
      %p69 = scmp.eq.s32.totalorder %s26, 1
      %p70 = por %p68, %p69
      %p72 = scmp.ne.s32.totalorder %s55, %s71
      %p73 = scmp.eq.s32.totalorder %s26, 0
      %p74 = por %p72, %p73
      %s75 = ssub.s32 %s27, %s46
      %s76 = ssub.s32 %s29, %s38
      %s77 = sor.u32 %s75, %s76
      %p78 = scmp.eq.s32.totalorder %s77, 0
      %s80 = sadd.s32 %s79, 1
      %s81 = scalar_select %p78, %s79, %s80
      %p84 = pneg %p78
      %p85 = scmp.eq.s32.totalorder %s20, 1
      %p86 = por %p84, %p85
      %p87 = scmp.ne.s32.totalorder %s79, %s82
      %p88 = scmp.eq.s32.totalorder %s20, 0
      %p89 = por %p87, %p88
      %p90 = scmp.ne.s32.totalorder %s79, %s82
      %p91 = scmp.eq.s32.totalorder %s25, 1
      %p92 = por %p90, %p91
      %p93 = scmp.ne.s32.totalorder %s82, %s83
      %p94 = scmp.eq.s32.totalorder %s25, 0
      %p95 = por %p93, %p94
      %p96 = scmp.ne.s32.totalorder %s82, %s83
      %p97 = scmp.eq.s32.totalorder %s26, 1
      %p98 = por %p96, %p97
      %p100 = scmp.ne.s32.totalorder %s83, %s99
      %p101 = scmp.eq.s32.totalorder %s26, 0
      %p102 = por %p100, %p101
      %s103 = ssub.s32 %s27, %s46
      %s104 = ssub.s32 %s28, %s42
      %s105 = sor.u32 %s103, %s104
      %p106 = scmp.eq.s32.totalorder %s105, 0
      %s108 = sadd.s32 %s107, 1
      %s109 = scalar_select %p106, %s107, %s108
      %p112 = pneg %p106
      %p113 = scmp.eq.s32.totalorder %s20, 1
      %p114 = por %p112, %p113
      %p115 = scmp.ne.s32.totalorder %s107, %s110
      %p116 = scmp.eq.s32.totalorder %s20, 0
      %p117 = por %p115, %p116
      %p118 = scmp.ne.s32.totalorder %s107, %s110
      %p119 = scmp.eq.s32.totalorder %s25, 1
      %p120 = por %p118, %p119
      %p121 = scmp.ne.s32.totalorder %s110, %s111
      %p122 = scmp.eq.s32.totalorder %s25, 0
      %p123 = por %p121, %p122
      %p124 = scmp.ne.s32.totalorder %s110, %s111
      %p125 = scmp.eq.s32.totalorder %s26, 1
      %p126 = por %p124, %p125
      %p128 = scmp.ne.s32.totalorder %s111, %s127
      %p129 = scmp.eq.s32.totalorder %s26, 0
      %p130 = por %p128, %p129
      %s131 = ssub.s32 %s27, %s46
      %s132 = ssub.s32 %s29, %s38
      %s133 = sor.u32 %s131, %s132
      %p134 = scmp.eq.s32.totalorder %s133, 0
      %s136 = sadd.s32 %s135, 1
      %s137 = scalar_select %p134, %s135, %s136
      %p140 = pneg %p134
      %p141 = scmp.eq.s32.totalorder %s20, 1
      %p142 = por %p140, %p141
      %p143 = scmp.ne.s32.totalorder %s135, %s138
      %p144 = scmp.eq.s32.totalorder %s20, 0
      %p145 = por %p143, %p144
      %p146 = scmp.ne.s32.totalorder %s135, %s138
      %p147 = scmp.eq.s32.totalorder %s25, 1
      %p148 = por %p146, %p147
      %p149 = scmp.ne.s32.totalorder %s138, %s139
      %p150 = scmp.eq.s32.totalorder %s25, 0
      %p151 = por %p149, %p150
      %p152 = scmp.ne.s32.totalorder %s138, %s139
      %p153 = scmp.eq.s32.totalorder %s26, 1
      %p154 = por %p152, %p153
      %p156 = scmp.ne.s32.totalorder %s139, %s155
      %p157 = scmp.eq.s32.totalorder %s26, 0
      %p158 = por %p156, %p157
      %s159 = ssub.s32 %s27, %s46
      %s160 = ssub.s32 %s28, %s42
      %s161 = sor.u32 %s159, %s160
      %s162 = ssub.s32 %s29, %s38
      %s163 = sor.u32 %s161, %s162
      %p164 = scmp.eq.s32.totalorder %s163, 0
      %s166 = sadd.s32 %s165, 1
      %s167 = scalar_select %p164, %s165, %s166
      %p170 = pneg %p164
      %p171 = scmp.eq.s32.totalorder %s20, 1
      %p172 = por %p170, %p171
      %p173 = scmp.ne.s32.totalorder %s165, %s168
      %p174 = scmp.eq.s32.totalorder %s20, 0
      %p175 = por %p173, %p174
      %p176 = scmp.ne.s32.totalorder %s165, %s168
      %p177 = scmp.eq.s32.totalorder %s25, 1
      %p178 = por %p176, %p177
      %p179 = scmp.ne.s32.totalorder %s168, %s169
      %p180 = scmp.eq.s32.totalorder %s25, 0
      %p181 = por %p179, %p180
      %p182 = scmp.ne.s32.totalorder %s168, %s169
      %p183 = scmp.eq.s32.totalorder %s26, 1
      %p184 = por %p182, %p183
      %p186 = scmp.ne.s32.totalorder %s169, %s185
      %p187 = scmp.eq.s32.totalorder %s26, 0
      %p188 = por %p186, %p187
      %p189 = scmp.le.s32.totalorder 1, %s20
      %p190 = scmp.lt.s32.totalorder %s20, 3
      %p191 = pnand %p189, %p190
      %p192 = pneg %p191
      // Predicated region
      $region9: #{_cost_blocks_device.1} parent=5 // pred_check
        _
      $region10: #{_cost_blocks_device.1} parent=5 // pred_check_branch
        %194 = sbr.rel (%p191) target = $region12
      $region11: #{_cost_blocks_device.1} parent=5 // pred_region
        %s195 = ssub.s32 %s20, 1
      $region12: #{_cost_blocks_device.1} parent=5 // pred_fallthru
        _
      %p196 = scmp.lt.s32.totalorder %s20, 2
      // Predicated region
      $region13: #{_cost_blocks_device.1} parent=5 // pred_check
        %p197 = pneg %p196
      $region14: #{_cost_blocks_device.1} parent=5 // pred_check_branch
        %199 = sbr.rel (%p197) target = $region16
      $region15: #{_cost_blocks_device.1} parent=5 // pred_region
        // Predicated region
        $region17: #{_cost_blocks_device.1} parent=15 // pred_check
          %p200 = pneg %p61
        $region18: #{_cost_blocks_device.1} parent=15 // pred_check_branch
          %202 = sbr.rel (%p200) target = $region20
        $region19: #{_cost_blocks_device.1} parent=15 // pred_region
          %p203 = scmp.lt.s32.totalorder %s27, 1
          %s204 = scalar_select %p203, %s27, 1
          %p205 = scmp.lt.s32.totalorder %s28, 0
          %s206 = scalar_select %p205, %s28, 0
          %s207 = sadd.s32 %s206, %s204
          %s208 = smul.addr %s207, 8
          %s209 = scalar_lea.vmem %s1, %s208
        $region20: #{_cost_blocks_device.1} parent=15 // pred_fallthru
          _
        // Predicated region
        $region21: #{_cost_blocks_device.1} parent=15 // pred_check
          %p210 = pneg %p89
        $region22: #{_cost_blocks_device.1} parent=15 // pred_check_branch
          %212 = sbr.rel (%p210) target = $region24
        $region23: #{_cost_blocks_device.1} parent=15 // pred_region
          %p213 = scmp.lt.s32.totalorder %s27, 1
          %s214 = scalar_select %p213, %s27, 1
          %p215 = scmp.lt.s32.totalorder %s29, 0
          %s216 = scalar_select %p215, %s29, 0
          %s217 = sadd.s32 %s216, %s214
          %s218 = smul.addr %s217, 4
          %s219 = scalar_lea.vmem %s2, %s218
        $region24: #{_cost_blocks_device.1} parent=15 // pred_fallthru
          _
        // Predicated region
        $region25: #{_cost_blocks_device.1} parent=15 // pred_check
          %p220 = pneg %p117
        $region26: #{_cost_blocks_device.1} parent=15 // pred_check_branch
          %222 = sbr.rel (%p220) target = $region28
        $region27: #{_cost_blocks_device.1} parent=15 // pred_region
          %p223 = scmp.lt.s32.totalorder %s27, 1
          %s224 = scalar_select %p223, %s27, 1
          %p225 = scmp.lt.s32.totalorder %s28, 0
          %s226 = scalar_select %p225, %s28, 0
          %s227 = sadd.s32 %s226, %s224
          %s228 = smul.addr %s227, 8
          %s229 = scalar_lea.vmem %s3, %s228
        $region28: #{_cost_blocks_device.1} parent=15 // pred_fallthru
          _
        // Predicated region
        $region29: #{_cost_blocks_device.1} parent=15 // pred_check
          %p230 = pneg %p145
        $region30: #{_cost_blocks_device.1} parent=15 // pred_check_branch
          %232 = sbr.rel (%p230) target = $region32
        $region31: #{_cost_blocks_device.1} parent=15 // pred_region
          %p233 = scmp.lt.s32.totalorder %s27, 1
          %s234 = scalar_select %p233, %s27, 1
          %p235 = scmp.lt.s32.totalorder %s29, 0
          %s236 = scalar_select %p235, %s29, 0
          %s237 = sadd.s32 %s236, %s234
          %s238 = smul.addr %s237, 2
          %s239 = scalar_lea.vmem %s4, %s238
        $region32: #{_cost_blocks_device.1} parent=15 // pred_fallthru
          _
      $region16: #{_cost_blocks_device.1} parent=5 // pred_fallthru
        _
      %p240 = scmp.le.s32.totalorder 1, %s20
      %p241 = scmp.lt.s32.totalorder %s20, 3
      %p242 = pnand %p240, %p241
      %p243 = pneg %p242
      // Predicated region
      $region33: #{_cost_blocks_device.1} parent=5 // pred_check
        _
      $region34: #{_cost_blocks_device.1} parent=5 // pred_check_branch
        %245 = sbr.rel (%p242) target = $region36
      $region35: #{_cost_blocks_device.1} parent=5 // pred_region
        %s246 = ssub.s32 %s20, 1
        %p247 = scmp.lt.s32.totalorder %s30, 1
        %s248 = scalar_select %p247, %s30, 1
        %p249 = scmp.lt.s32.totalorder %s31, 0
        %s250 = scalar_select %p249, %s31, 0
        %s251 = sadd.s32 %s250, %s248
        %s252 = smul.addr %s251, 8
        %s253 = scalar_lea.vmem %s1, %s252
        %p254 = pneg %p67
        %p255 = pneg %p64
        %p256 = scmp.lt.s32.totalorder %s30, 1
        %s257 = scalar_select %p256, %s30, 1
        %p258 = scmp.lt.s32.totalorder %s32, 0
        %s259 = scalar_select %p258, %s32, 0
        %s260 = sadd.s32 %s259, %s257
        %s261 = smul.addr %s260, 4
        %s262 = scalar_lea.vmem %s2, %s261
        %p263 = pneg %p95
        %p264 = pneg %p92
        %p265 = scmp.lt.s32.totalorder %s30, 1
        %s266 = scalar_select %p265, %s30, 1
        %p267 = scmp.lt.s32.totalorder %s31, 0
        %s268 = scalar_select %p267, %s31, 0
        %s269 = sadd.s32 %s268, %s266
        %s270 = smul.addr %s269, 8
        %s271 = scalar_lea.vmem %s3, %s270
        %p272 = pneg %p123
        %p273 = pneg %p120
        %p274 = scmp.lt.s32.totalorder %s30, 1
        %s275 = scalar_select %p274, %s30, 1
        %p276 = scmp.lt.s32.totalorder %s32, 0
        %s277 = scalar_select %p276, %s32, 0
        %s278 = sadd.s32 %s277, %s275
        %s279 = smul.addr %s278, 2
        %s280 = scalar_lea.vmem %s4, %s279
        %p281 = pneg %p151
        %p282 = pneg %p148
        %p283 = pneg %p181
        %p284 = pneg %p178
        %s285 = sand.u32 %s168, 1
        %s286 = scalar_lea.sflag [#allocation7], %s285
        %s287 = sand.u32 %s168, 1
        %s288 = smul.addr %s287, 8
        %s289 = scalar_lea.vmem [#allocation6], %s288
        %p290 = scmp.lt.s32.totalorder %s30, 1
        %s291 = scalar_select %p290, %s30, 1
        %p292 = scmp.lt.s32.totalorder %s31, 0
        %s293 = scalar_select %p292, %s31, 0
        %s294 = sadd.s32 %s293, %s291
        %s295 = smul.addr %s294, 8
        %s296 = scalar_lea.vmem %s1, %s295
        %p297 = scmp.lt.s32.totalorder %s30, 1
        %s298 = scalar_select %p297, %s30, 1
        %p299 = scmp.lt.s32.totalorder %s32, 0
        %s300 = scalar_select %p299, %s32, 0
        %s301 = sadd.s32 %s300, %s298
        %s302 = smul.addr %s301, 4
        %s303 = scalar_lea.vmem %s2, %s302
        %p304 = scmp.lt.s32.totalorder %s30, 1
        %s305 = scalar_select %p304, %s30, 1
        %p306 = scmp.lt.s32.totalorder %s31, 0
        %s307 = scalar_select %p306, %s31, 0
        %s308 = sadd.s32 %s307, %s305
        %s309 = smul.addr %s308, 8
        %s310 = scalar_lea.vmem %s3, %s309
        %p311 = scmp.lt.s32.totalorder %s30, 1
        %s312 = scalar_select %p311, %s30, 1
        %p313 = scmp.lt.s32.totalorder %s32, 0
        %s314 = scalar_select %p313, %s32, 0
        %s315 = sadd.s32 %s314, %s312
        %s316 = smul.addr %s315, 2
        %s317 = scalar_lea.vmem %s4, %s316
        %s318 = sld [smem:[#allocation5 + %s30]]
        %s319 = smul.u32 %s32, 128
        %p320 = scmp.lt.s32.totalorder %s319, %s318
        // Predicated region
        $region37: #{_cost_blocks_device.1} parent=35 // pred_check
          %p321 = pneg %p320
        $region38: #{_cost_blocks_device.1} parent=35 // pred_check_branch
          %323 = sbr.rel (%p321) target = $region40
        $region39: #{_cost_blocks_device.1} parent=35 // pred_region
          %p324 = scmp.eq.s32.totalorder %s32, 0
          // Predicated region
          $region41: #{_cost_blocks_device.1} parent=39 // pred_check
            %p325 = pneg %p324
          $region42: #{_cost_blocks_device.1} parent=39 // pred_check_branch
            %327 = sbr.rel (%p325) target = $region44
          $region43: #{_cost_blocks_device.1} parent=39 // pred_region
            %v328 = vld [vmem:[%s296] sm:$0xff]
            %vm329 = vcmp.ne.f32.partialorder %v328, %v328
            %v330 = vsel %vm329, -100.0, %v328
            %v331 = vmax.f32 %v330, -100.0
            %v332 = vmin.f32 %v331, 100.0
            %v333 = vmul.f32 %v332, -0.5
            %vm334 = vcmask 31744
            %335 = vst.msk [vmem:[#allocation2] sm:$0xff] %vm334, %v333
            %v336 = vmax.f32 %v332, 0.0
            %v337 = vand.u32 2147483647, %v332
            %v338 = vsub.f32 0.0, %v337
            %v339 = vmul.f32 %v338, 1.442695
            %v340 = vpow.pop %v339
            %v341 = vadd.f32 %v340, 1.0
            %v342 = vlog2.pop %v341
            %v343 = vmul.f32 %v342, 0.6931472
            %v344 = vadd.f32 %v336, %v343
            %v345 = vsel %vm334, %v344, 0.0
            %346 = vadd.xlane.f32.xlu0 %v345
            %v347 = vpop.xlane.xlu0 %346
            %v348 = vmul.f32 %v347, 0.5
            %vm349 = vcmask 39968
            %350 = vst.msk [vmem:[#allocation2] sm:$0xff] %vm349, %v348
            %v351 = vld [vmem:[%s310] sm:$0xff]
            %v352 = vmul.f32 %v351, 5.0
            %vm353 = vcmask 15360
            %354 = vst.msk [vmem:[#allocation3] sm:$0xff] %vm353, %v352
          $region44: #{_cost_blocks_device.1} parent=39 // pred_fallthru
            _
          %v355 = vld [vmem:[%s303] sm:$0x7]
          %v356 = vunpack.c.l.bf16 %v355
          %v357 = vld [vmem:[#allocation2] sm:$0xff]
          %v358 = vld [vmem:[%s317] sm:$0x3]
          %v359 = vmul.f32 %v358, 5.0
          %v360 = vld [vmem:[#allocation3] sm:$0xff]
          %362 = vset.pattern.permute.xlu0 0
          %363 = vperm.xlu0 %362, %v360
          %v364 = vpop.permute.xlu0 %363
          %v366 = vlaneseq
          %v367 = vshrl.u32 %v366, 7
          %v368 = vsub.s32 0, %v367
          %v369 = vrot.slane %v359, %v368
          %v370 = vsub.f32 %v364, %v369
          %v371 = vand.u32 2147483647, %v370
          %372 = vset.pattern.permute.xlu0 1
          %373 = vperm.xlu0 %372, %v360
          %v374 = vpop.permute.xlu0 %373
          %v376 = vlaneseq
          %v377 = vshrl.u32 %v376, 7
          %v378 = vsub.s32 1, %v377
          %v379 = vrot.slane %v359, %v378
          %v380 = vsub.f32 %v374, %v379
          %v381 = vand.u32 2147483647, %v380
          %v382 = vadd.f32 %v371, %v381
          %vm383 = vcmask 39936
          %v385 = vsel %vm383, %v357, 0
          %vm387 = vcmask 1044480
          %v389 = vsel %vm387, %v356, 0
          %391 = vmatprep.subr.mxu0 0.0
          %392 = vmatpush1.msra.mxu0 %v389
          %393 = vmatprep.subr.mxu0 0.0
          %394 = vmatpush1.msra.mxu0 0.0
          %395 = vmatprep.subr.mxu0 0.0
          %396 = vmatpush1.msra.mxu0 0.0
          %397 = vmatprep.subr.mxu0 0.0
          %398 = vmatpush1.msra.mxu0 0.0
          %399 = vmatprep.subr.mxu0 0.0
          %400 = vmatpush1.msra.mxu0 0.0
          %401 = vmatprep.subr.mxu0 0.0
          %402 = vmatpush1.msra.mxu0 0.0
          %403 = vmatprep.subr.mxu0 0.0
          %404 = vmatpush1.msra.mxu0 0.0
          %405 = vmatprep.subr.mxu0 0.0
          %406 = vmatpush1.msra.mxu0 0.0
          %407 = vmatprep.subr.mxu0 0.0
          %408 = vmatpush1.msra.mxu0 0.0
          %409 = vmatprep.subr.mxu0 0.0
          %410 = vmatpush1.msra.mxu0 0.0
          %411 = vmatprep.subr.mxu0 0.0
          %412 = vmatpush1.msra.mxu0 0.0
          %413 = vmatprep.subr.mxu0 0.0
          %414 = vmatpush1.msra.mxu0 0.0
          %415 = vmatprep.subr.mxu0 0.0
          %416 = vmatpush1.msra.mxu0 0.0
          %417 = vmatprep.subr.mxu0 0.0
          %418 = vmatpush1.msra.mxu0 0.0
          %419 = vmatprep.subr.mxu0 0.0
          %420 = vmatpush1.msra.mxu0 0.0
          %421 = vmatprep.subr.mxu0 0.0
          %422 = vmatpush1.msra.mxu0 0.0
          %423 = vmatprep.subr.mxu0 0.0
          %424 = vmatpush1.msra.mxu0 0.0
          %425 = vmatprep.subr.mxu0 0.0
          %426 = vmatpush1.msra.mxu0 0.0
          %427 = vmatprep.subr.mxu0 0.0
          %428 = vmatpush1.msra.mxu0 0.0
          %429 = vmatprep.subr.mxu0 0.0
          %430 = vmatpush1.msra.mxu0 0.0
          %431 = vmatprep.subr.mxu0 0.0
          %432 = vmatpush1.msra.mxu0 0.0
          %433 = vmatprep.subr.mxu0 0.0
          %434 = vmatpush1.msra.mxu0 0.0
          %435 = vmatprep.subr.mxu0 0.0
          %436 = vmatpush1.msra.mxu0 0.0
          %437 = vmatprep.subr.mxu0 0.0
          %438 = vmatpush1.msra.mxu0 0.0
          %439 = vmatprep.subr.mxu0 0.0
          %440 = vmatpush1.msra.mxu0 0.0
          %441 = vmatprep.subr.mxu0 0.0
          %442 = vmatpush1.msra.mxu0 0.0
          %443 = vmatprep.subr.mxu0 0.0
          %444 = vmatpush1.msra.mxu0 0.0
          %445 = vmatprep.subr.mxu0 0.0
          %446 = vmatpush1.msra.mxu0 0.0
          %447 = vmatprep.subr.mxu0 0.0
          %448 = vmatpush1.msra.mxu0 0.0
          %449 = vmatprep.subr.mxu0 0.0
          %450 = vmatpush1.msra.mxu0 0.0
          %451 = vmatprep.subr.mxu0 0.0
          %452 = vmatpush1.msra.mxu0 0.0
          %453 = vmatprep.subr.mxu0 0.0
          %454 = vmatpush1.msra.mxu0 0.0
          %455 = vmatprep.mubr.f32.mxu0 0.0
          %456 = vmatmul.mubr.f32.gmra.mrb[0].mxu0 %v385
          %v457 = vpop.f32.mrb[0].mxu0
          %v458 = vadd.f32 %v382, %v457
          %v459 = vpop.f32.mrb[0].mxu0
          %460 = vdwg.mxu0
          %461 = vst [vmem:[%s289] sm:$0xff] %v458
        $region40: #{_cost_blocks_device.1} parent=35 // pred_fallthru
          _
        %s462 = sand.u32 %s168, 1
        %s463 = scalar_lea.sflag [#allocation7], %s462
        %s464 = sand.u32 %s168, 1
        %s465 = smul.addr %s464, 8
        %s466 = scalar_lea.vmem [#allocation6], %s465
        // Predicated region
        $region45: #{_cost_blocks_device.1} parent=35 // pred_check
          %p467 = pneg %p178
        $region46: #{_cost_blocks_device.1} parent=35 // pred_check_branch
          %469 = sbr.rel (%p467) target = $region48
        $region47: #{_cost_blocks_device.1} parent=35 // pred_region
          %s471 = ssub.s32 128, 128
          %472 = vsyncadd %s463, %s471
          %s473 = sadd.s32 %s32, %s31
          %s474 = sadd.s32 %s473, %s30
          %s475 = smul.addr %s474, 128
          %s476 = scalar_lea.hbm %s5, %s475
          %s478 = sshll.u32 %s466, 4
          %s479 = int_to_ptr.vmem [resolvable:$true] %s478
          %481 = dma.vmem_to_hbm [thread:$0]  %s479, 128, %s476, %s463
        $region48: #{_cost_blocks_device.1} parent=35 // pred_fallthru
          _
      $region36: #{_cost_blocks_device.1} parent=5 // pred_fallthru
        _
      %p482 = scmp.le.s32.totalorder 2, %s20
      // Predicated region
      $region49: #{_cost_blocks_device.1} parent=5 // pred_check
        %p483 = pneg %p482
      $region50: #{_cost_blocks_device.1} parent=5 // pred_check_branch
        %485 = sbr.rel (%p483) target = $region52
      $region51: #{_cost_blocks_device.1} parent=5 // pred_region
        %s486 = ssub.s32 %s20, 2
        // Predicated region
        $region53: #{_cost_blocks_device.1} parent=51 // pred_check
          %p487 = pneg %p184
        $region54: #{_cost_blocks_device.1} parent=51 // pred_check_branch
          %489 = sbr.rel (%p487) target = $region56
        $region55: #{_cost_blocks_device.1} parent=51 // pred_region
          %s490 = sand.u32 %s169, 1
          %s491 = scalar_lea.sflag [#allocation7], %s490
          %s492 = sand.u32 %s169, 1
          %s493 = smul.addr %s492, 8
          %s494 = scalar_lea.vmem [#allocation6], %s493
          %495 = dma.done %s491, 128
        $region56: #{_cost_blocks_device.1} parent=51 // pred_fallthru
          _
      $region52: #{_cost_blocks_device.1} parent=5 // pred_fallthru
        _
    $region6: #{_cost_blocks_device.1} parent=1 // loop_footer
      %s24 = sadd.s32 1, %s20
    $region7: #{_cost_blocks_device.1} parent=1 // loop_footer_branch
      %19 = sbr.rel target = $region3
    $region8: #{_cost_blocks_device.1} parent=1 // loop_exit
      _
    %496 = vsyncpa [#allocation7], 1
    %s497 = scalar_lea.sflag [#allocation7], 1
    %498 = vsyncpa %s497, 1

</llo_original>
